<compile_context>
chip_gen: v5e
topology: v5e:2x2
jax: 0.10.0
libtpu: 0.0.40
codegen_flags: <defaults>
</compile_context>

<pallas_src>
import functools

import jax
import jax.numpy as jnp
from jax.experimental import pallas as pl
from jax.experimental.pallas import tpu as pltpu


def _round_up(x, m):
    return (x + m - 1) // m * m


def _mlp_softmax_kernel(x_ref, w1_ref, b1_ref, w2_ref, b2_ref, w3_ref, b3_ref,
                        o_ref, *, d_out):
    """fc1 -> relu -> fc2 -> relu -> fc3 -> softmax(dim=1); one batch tile per grid step."""
    mm_dtype = w1_ref.dtype  # f32, or bf16 when use_bf16_matmul=True

    x = x_ref[...].astype(mm_dtype)

    # fc1 + ReLU (f32 MXU accumulation; bias/ReLU in f32)
    h1 = jnp.dot(x, w1_ref[...], preferred_element_type=jnp.float32) + b1_ref[...]
    h1 = jnp.maximum(h1, 0.0)

    # fc2 + ReLU
    h2 = jnp.dot(h1.astype(mm_dtype), w2_ref[...],
                 preferred_element_type=jnp.float32) + b2_ref[...]
    h2 = jnp.maximum(h2, 0.0)

    # fc3 — padded output lanes get logit exactly -1e30 (zero w3 columns + -1e30 b3 lanes),
    # so they contribute exactly 0 to the softmax: no in-kernel mask needed.
    logits = jnp.dot(h2.astype(mm_dtype), w3_ref[...],
                     preferred_element_type=jnp.float32) + b3_ref[...]

    # Numerically stable softmax over the feature axis.
    m = jnp.max(logits, axis=1, keepdims=True)
    e = jnp.exp(logits - m)
    denom = jnp.sum(e, axis=1, keepdims=True)
    probs = e / denom

    # Store only the real output features -> no 128-lane HBM write amplification.
    o_ref[...] = probs[:, :d_out].astype(o_ref.dtype)


@functools.partial(jax.jit, static_argnames=("batch_tile", "use_bf16_matmul"))
def simple_nn_forward(x, params, batch_tile=None, use_bf16_matmul=False):
    """Pallas forward pass of SimpleNN.

    x:      [B, input_dim] float32 (any B; partial last tile handled by masked writes)
    params: dict with w1 [input_dim,64], b1 [1,64], w2 [64,32], b2 [1,32],
            w3 [32,output_dim], b3 [1,output_dim]  (weights already transposed to [in,out])
    """
    w1, b1 = params["w1"], params["b1"]
    w2, b2 = params["w2"], params["b2"]
    w3, b3 = params["w3"], params["b3"]

    B, d_in = x.shape
    h1 = w1.shape[1]
    h2 = w2.shape[1]
    d_out = w3.shape[1]

    # ---- lane-pad the (tiny) weights so every dot runs at native 128-lane width.
    # Zero padding keeps ReLU outputs exactly 0 in the padded lanes.
    h1_pad = _round_up(h1, 128)
    h2_pad = _round_up(h2, 128)
    d_out_pad = _round_up(d_out, 128)
    w1 = jnp.pad(w1, ((0, 0), (0, h1_pad - h1)))
    b1 = jnp.pad(b1, ((0, 0), (0, h1_pad - h1)))
    w2 = jnp.pad(w2, ((0, h1_pad - h1), (0, h2_pad - h2)))
    b2 = jnp.pad(b2, ((0, 0), (0, h2_pad - h2)))
    w3 = jnp.pad(w3, ((0, h2_pad - h2), (0, d_out_pad - d_out)))
    # Bake the softmax mask into b3: padded lanes get -1e30 -> exp underflows to exactly 0.
    b3 = jnp.pad(b3, ((0, 0), (0, d_out_pad - d_out)), constant_values=-1e30)

    if use_bf16_matmul:
        # bf16 weights into the MXU (halves weight DMA, single-pass MXU on v6e/v7x);
        # biases and all softmax math stay f32; f32 accumulation in-kernel.
        w1, w2, w3 = (w.astype(jnp.bfloat16) for w in (w1, w2, w3))

    # ---- batch tile: large (amortize ~0.35us/step grid overhead) but aim for >= 4 grid
    # steps when B allows, so v7x's two TensorCores each get >= 2 steps (per-core
    # double-buffered pipelining engages) and 1-TC chips get >= 3-4 steps.
    if batch_tile is None:
        bt = min(2048, _round_up(B, 8))
        if B >= 32:
            bt = min(bt, _round_up(pl.cdiv(B, 4), 8))
    else:
        bt = batch_tile
    bt = max(8, _round_up(bt, 8))
    # Keep the double-buffered x tile + activations modest so large input_dim still fits
    # comfortably inside scoped VMEM on every generation.
    bt = min(bt, max(64, _round_up((4 * 1024 * 1024) // (4 * max(d_in, d_out_pad)), 8)))

    grid = (pl.cdiv(B, bt),)  # no batch padding: partial last block's writes are masked
    kernel = functools.partial(_mlp_softmax_kernel, d_out=d_out)

    in_specs = [
        pl.BlockSpec((bt, d_in), lambda i: (i, 0)),            # x tile (streamed)
        pl.BlockSpec((d_in, h1_pad), lambda i: (0, 0)),        # w1 (resident in VMEM)
        pl.BlockSpec((1, h1_pad), lambda i: (0, 0)),           # b1
        pl.BlockSpec((h1_pad, h2_pad), lambda i: (0, 0)),      # w2
        pl.BlockSpec((1, h2_pad), lambda i: (0, 0)),           # b2
        pl.BlockSpec((h2_pad, d_out_pad), lambda i: (0, 0)),   # w3 (lane-padded, zeros)
        pl.BlockSpec((1, d_out_pad), lambda i: (0, 0)),        # b3 (-1e30 in padded lanes)
    ]
    # Unpadded output: block last dim == full d_out (legal); 32x fewer HBM write bytes
    # than a 128-lane-padded output and no wrapper slice pass.
    out_specs = pl.BlockSpec((bt, d_out), lambda i: (i, 0))

    return pl.pallas_call(
        kernel,
        out_shape=jax.ShapeDtypeStruct((B, d_out), jnp.float32),
        grid_spec=pltpu.PrefetchScalarGridSpec(
            num_scalar_prefetch=0,
            grid=grid,
            in_specs=in_specs,
            out_specs=out_specs,
        ),
        compiler_params=pltpu.CompilerParams(
            dimension_semantics=("parallel",),
            vmem_limit_bytes=48 * 1024 * 1024,  # above v5e's 16 MiB default, headroom on v7x
        ),
    )(x, w1, b1, w2, b2, w3, b3)


def init_params(key, input_dim, output_dim):
    """Deterministic init mimicking nn.Linear's U(-1/sqrt(fan_in), 1/sqrt(fan_in)).

    Weights are stored transposed ([in, out]) so the kernel does x @ W + b.
    """
    def linear(k, fan_in, fan_out):
        kw, kb = jax.random.split(k)
        bound = 1.0 / jnp.sqrt(fan_in)
        w = jax.random.uniform(kw, (fan_in, fan_out), jnp.float32, -bound, bound)
        b = jax.random.uniform(kb, (1, fan_out), jnp.float32, -bound, bound)
        return w, b

    k1, k2, k3 = jax.random.split(key, 3)
    w1, b1 = linear(k1, input_dim, 64)
    w2, b2 = linear(k2, 64, 32)
    w3, b3 = linear(k3, 32, output_dim)
    return {"w1": w1, "b1": b1, "w2": w2, "b2": b2, "w3": w3, "b3": b3}


def _reference_forward(x, p):
    h1 = jnp.maximum(x @ p["w1"] + p["b1"], 0.0)
    h2 = jnp.maximum(h1 @ p["w2"] + p["b2"], 0.0)
    logits = h2 @ p["w3"] + p["b3"]
    return jax.nn.softmax(logits, axis=1)


if __name__ == "__main__":
    key = jax.random.PRNGKey(0)
    kx, kp = jax.random.split(key)

    # Not a multiple of the auto tile: exercises the masked partial last block
    # (auto tile -> bt=56, grid=(4,); last block covers rows 168..223 of 200).
    batch = 200
    input_dim = 16
    output_dim = 4

    x = jax.random.normal(kx, (batch, input_dim), jnp.float32)
    params = init_params(kp, input_dim, output_dim)

    out = jax.block_until_ready(simple_nn_forward(x, params))
    ref = _reference_forward(x, params)

    assert out.shape == (batch, output_dim), out.shape
    assert jnp.allclose(out, ref, atol=2e-3, rtol=2e-3), "mismatch vs reference"
    assert jnp.allclose(jnp.sum(out, axis=1), 1.0, atol=1e-3), "softmax rows must sum to 1"

    # Optional bf16-matmul path (v6e/v7x MXU throughput headroom); looser tolerance.
    out_bf16 = jax.block_until_ready(simple_nn_forward(x, params, use_bf16_matmul=True))
    assert jnp.allclose(out_bf16, ref, atol=5e-2, rtol=5e-2), "bf16 path mismatch"

    # TODO(synk): training-side ops (CrossEntropyLoss/optimizer) are out of scope for this
    # forward-pass kernel.
    print("KERNEL_OK")
</pallas_src>

<mosaic_0001>
module attributes {stable_mosaic.version = 11 : i64} {
  func.func @_mlp_softmax_kernel(%arg0: i32, %arg1: memref<56x16xf32, #tpu.memory_space<vmem>>, %arg2: memref<16x128xf32, #tpu.memory_space<vmem>>, %arg3: memref<1x128xf32, #tpu.memory_space<vmem>>, %arg4: memref<128x128xf32, #tpu.memory_space<vmem>>, %arg5: memref<1x128xf32, #tpu.memory_space<vmem>>, %arg6: memref<128x128xf32, #tpu.memory_space<vmem>>, %arg7: memref<1x128xf32, #tpu.memory_space<vmem>>, %arg8: memref<56x4xf32, #tpu.memory_space<vmem>>) attributes {dimension_semantics = [#tpu.dimension_semantics<parallel>], iteration_bounds = array<i64: 4>, scalar_prefetch = 0 : i64, scratch_operands = 0 : i64, tpu.core_type = #tpu.core_type<tc>, window_params = [{transform_indices = @transform_0, window_bounds = array<i64: 56, 16>}, {pipeline_mode = #tpu.pipeline_mode<synchronous>, transform_indices = @transform_1, window_bounds = array<i64: 16, 128>}, {pipeline_mode = #tpu.pipeline_mode<synchronous>, transform_indices = @transform_2, window_bounds = array<i64: 1, 128>}, {pipeline_mode = #tpu.pipeline_mode<synchronous>, transform_indices = @transform_3, window_bounds = array<i64: 128, 128>}, {pipeline_mode = #tpu.pipeline_mode<synchronous>, transform_indices = @transform_4, window_bounds = array<i64: 1, 128>}, {pipeline_mode = #tpu.pipeline_mode<synchronous>, transform_indices = @transform_5, window_bounds = array<i64: 128, 128>}, {pipeline_mode = #tpu.pipeline_mode<synchronous>, transform_indices = @transform_6, window_bounds = array<i64: 1, 128>}, {transform_indices = @transform_7, window_bounds = array<i64: 56, 4>}]} {
    %c0 = arith.constant 0 : index
    %c0_0 = arith.constant 0 : index
    %0 = vector.load %arg1[%c0, %c0_0] : memref<56x16xf32, #tpu.memory_space<vmem>>, vector<56x16xf32>
    %c0_1 = arith.constant 0 : index
    %c0_2 = arith.constant 0 : index
    %1 = vector.load %arg2[%c0_1, %c0_2] : memref<16x128xf32, #tpu.memory_space<vmem>>, vector<16x128xf32>
    %cst = arith.constant dense<0.000000e+00> : vector<56x128xf32>
    %2 = tpu.matmul %0, %1, %cst {dimension_numbers = #tpu.dot_dimension_numbers<[1], [0], [0], [1], [0, 0, 1, 1], [], []>} : vector<56x16xf32>, vector<16x128xf32>, vector<56x128xf32> -> vector<56x128xf32>
    %c0_3 = arith.constant 0 : index
    %c0_4 = arith.constant 0 : index
    %3 = vector.load %arg3[%c0_3, %c0_4] : memref<1x128xf32, #tpu.memory_space<vmem>>, vector<1x128xf32>
    %4 = vector.broadcast %3 : vector<1x128xf32> to vector<56x128xf32>
    %5 = arith.addf %2, %4 : vector<56x128xf32>
    %cst_5 = arith.constant 0.000000e+00 : f32
    %6 = vector.broadcast %cst_5 : f32 to vector<56x128xf32>
    %7 = arith.maximumf %5, %6 : vector<56x128xf32>
    %c0_6 = arith.constant 0 : index
    %c0_7 = arith.constant 0 : index
    %8 = vector.load %arg4[%c0_6, %c0_7] : memref<128x128xf32, #tpu.memory_space<vmem>>, vector<128x128xf32>
    %cst_8 = arith.constant dense<0.000000e+00> : vector<56x128xf32>
    %9 = tpu.matmul %7, %8, %cst_8 {dimension_numbers = #tpu.dot_dimension_numbers<[1], [0], [0], [1], [0, 0, 1, 1], [], []>} : vector<56x128xf32>, vector<128x128xf32>, vector<56x128xf32> -> vector<56x128xf32>
    %c0_9 = arith.constant 0 : index
    %c0_10 = arith.constant 0 : index
    %10 = vector.load %arg5[%c0_9, %c0_10] : memref<1x128xf32, #tpu.memory_space<vmem>>, vector<1x128xf32>
    %11 = vector.broadcast %10 : vector<1x128xf32> to vector<56x128xf32>
    %12 = arith.addf %9, %11 : vector<56x128xf32>
    %cst_11 = arith.constant 0.000000e+00 : f32
    %13 = vector.broadcast %cst_11 : f32 to vector<56x128xf32>
    %14 = arith.maximumf %12, %13 : vector<56x128xf32>
    %c0_12 = arith.constant 0 : index
    %c0_13 = arith.constant 0 : index
    %15 = vector.load %arg6[%c0_12, %c0_13] : memref<128x128xf32, #tpu.memory_space<vmem>>, vector<128x128xf32>
    %cst_14 = arith.constant dense<0.000000e+00> : vector<56x128xf32>
    %16 = tpu.matmul %14, %15, %cst_14 {dimension_numbers = #tpu.dot_dimension_numbers<[1], [0], [0], [1], [0, 0, 1, 1], [], []>} : vector<56x128xf32>, vector<128x128xf32>, vector<56x128xf32> -> vector<56x128xf32>
    %c0_15 = arith.constant 0 : index
    %c0_16 = arith.constant 0 : index
    %17 = vector.load %arg7[%c0_15, %c0_16] : memref<1x128xf32, #tpu.memory_space<vmem>>, vector<1x128xf32>
    %18 = vector.broadcast %17 : vector<1x128xf32> to vector<56x128xf32>
    %19 = arith.addf %16, %18 : vector<56x128xf32>
    %cst_17 = arith.constant dense<0xFF800000> : vector<56xf32>
    %20 = vector.multi_reduction <maximumf>, %19, %cst_17 [1] : vector<56x128xf32> to vector<56xf32>
    %21 = vector.shape_cast %20 : vector<56xf32> to vector<56x1xf32>
    %22 = vector.broadcast %21 : vector<56x1xf32> to vector<56x128xf32>
    %23 = arith.subf %19, %22 : vector<56x128xf32>
    %24 = math.exp %23 : vector<56x128xf32>
    %cst_18 = arith.constant dense<0.000000e+00> : vector<56xf32>
    %25 = vector.multi_reduction <add>, %24, %cst_18 [1] : vector<56x128xf32> to vector<56xf32>
    %26 = vector.shape_cast %25 : vector<56xf32> to vector<56x1xf32>
    %27 = vector.broadcast %26 : vector<56x1xf32> to vector<56x128xf32>
    %28 = arith.divf %24, %27 : vector<56x128xf32>
    %29 = vector.extract_strided_slice %28 {offsets = [0, 0], sizes = [56, 4], strides = [1, 1]} : vector<56x128xf32> to vector<56x4xf32>
    %c0_19 = arith.constant 0 : index
    %c0_20 = arith.constant 0 : index
    %30 = vector.load %arg8[%c0_19, %c0_20] : memref<56x4xf32, #tpu.memory_space<vmem>>, vector<56x4xf32>
    tpu.vector_store %arg8[%c0_19, %c0_20], %29 {strides = array<i32>} : memref<56x4xf32, #tpu.memory_space<vmem>>, vector<56x4xf32>,
    return
  }
  func.func @transform_0(%arg0: i32) -> (i32, i32) {
    %c0_i32 = arith.constant 0 : i32
    %c0_i32_0 = arith.constant 0 : i32
    return %arg0, %c0_i32 : i32, i32
  }
  func.func @transform_1(%arg0: i32) -> (i32, i32) {
    %c0_i32 = arith.constant 0 : i32
    %c0_i32_0 = arith.constant 0 : i32
    %c0_i32_1 = arith.constant 0 : i32
    return %c0_i32, %c0_i32_0 : i32, i32
  }
  func.func @transform_2(%arg0: i32) -> (i32, i32) {
    %c0_i32 = arith.constant 0 : i32
    %c0_i32_0 = arith.constant 0 : i32
    %c0_i32_1 = arith.constant 0 : i32
    return %c0_i32, %c0_i32_0 : i32, i32
  }
  func.func @transform_3(%arg0: i32) -> (i32, i32) {
    %c0_i32 = arith.constant 0 : i32
    %c0_i32_0 = arith.constant 0 : i32
    %c0_i32_1 = arith.constant 0 : i32
    return %c0_i32, %c0_i32_0 : i32, i32
  }
  func.func @transform_4(%arg0: i32) -> (i32, i32) {
    %c0_i32 = arith.constant 0 : i32
    %c0_i32_0 = arith.constant 0 : i32
    %c0_i32_1 = arith.constant 0 : i32
    return %c0_i32, %c0_i32_0 : i32, i32
  }
  func.func @transform_5(%arg0: i32) -> (i32, i32) {
    %c0_i32 = arith.constant 0 : i32
    %c0_i32_0 = arith.constant 0 : i32
    %c0_i32_1 = arith.constant 0 : i32
    return %c0_i32, %c0_i32_0 : i32, i32
  }
  func.func @transform_6(%arg0: i32) -> (i32, i32) {
    %c0_i32 = arith.constant 0 : i32
    %c0_i32_0 = arith.constant 0 : i32
    %c0_i32_1 = arith.constant 0 : i32
    return %c0_i32, %c0_i32_0 : i32, i32
  }
  func.func @transform_7(%arg0: i32) -> (i32, i32) {
    %c0_i32 = arith.constant 0 : i32
    %c0_i32_0 = arith.constant 0 : i32
    return %arg0, %c0_i32 : i32, i32
  }
}

</mosaic_0001>

<llo_original>
// kernel: simple_nn_forward.1
$region0: #{simple_nn_forward.1}
  #allocation0 [shape = 'u32[]', space=smem, size = 0x4, offset = 0x4, fixed_abs, tag = 'smem constant byte address 0x4 - core index']
  #allocation1 [shape = 'u32[72,128]{1,0:T(1,128)}', space=vmem, size = 0x9000, scoped, tag = 'internal scratch']
  %s0 = inlined_call_operand.vmem [shape: f32[200,16], index: 0, kind: input, shape index: {}]
  %s1 = inlined_call_operand.vmem [shape: f32[16,128], index: 1, kind: input, shape index: {}]
  %s2 = inlined_call_operand.vmem [shape: f32[1,128], index: 2, kind: input, shape index: {}]
  %s3 = inlined_call_operand.vmem [shape: f32[128,128], index: 3, kind: input, shape index: {}]
  %s4 = inlined_call_operand.vmem [shape: f32[1,128], index: 4, kind: input, shape index: {}]
  %s5 = inlined_call_operand.vmem [shape: f32[128,128], index: 5, kind: input, shape index: {}]
  %s6 = inlined_call_operand.vmem [shape: f32[1,128], index: 6, kind: input, shape index: {}]
  %s7 = inlined_call_operand.vmem [shape: f32[200,4], index: 7, kind: output, shape index: {}]
  %s8 = sld [smem:[#allocation0]]
  $region109: #{simple_nn_forward.1} parent=0
    _
  %s10 = ssub.s32 1, %s8
  %s11 = scalar_select 0, %s10, %s8
  $region1: #{simple_nn_forward.1} parent=0
    #allocation2 [shape = 'u8[57344]{0}', space=vmem, size = 0xe000, scoped, tag = 'output window, operand 0']
    loop: start=0, step=1, limit=6
    $region2: #{simple_nn_forward.1} parent=1 // loop_pre_header
      _
    $region3: #{simple_nn_forward.1} parent=1 // loop_header
      %s13 = sphi 0, %s17
      %p14 = scmp.ge.s32.totalorder %s13, 6
      %s23 = sphi 0, %s25
      %s26 = sphi 0, %s23
      %s27 = sphi 0, %s26
      %s43 = sphi 0, %s27
      %s47 = sphi 0, %s47
      %s49 = sphi 0, %s47
      %s50 = sphi 0, %s49
      %s64 = sphi 0, %s50
      %s68 = sphi 0, %s68
      %s70 = sphi 0, %s68
      %s71 = sphi 0, %s70
      %s85 = sphi 0, %s71
      %s89 = sphi 0, %s89
      %s91 = sphi 0, %s89
      %s92 = sphi 0, %s91
      %s106 = sphi 0, %s92
      %s110 = sphi 0, %s110
      %s112 = sphi 0, %s110
      %s113 = sphi 0, %s112
      %s127 = sphi 0, %s113
      %s131 = sphi 0, %s131
      %s133 = sphi 0, %s131
      %s134 = sphi 0, %s133
      %s148 = sphi 0, %s134
      %s152 = sphi 0, %s152
      %s154 = sphi 0, %s152
      %s155 = sphi 0, %s154
      %s169 = sphi 0, %s155
      %s175 = sphi 0, %s177
      %s178 = sphi 0, %s175
      %s179 = sphi 0, %s178
      %s195 = sphi 0, %s179
    $region4: #{simple_nn_forward.1} parent=1 // loop_header_branch
      %16 = sbr.rel (%p14) target = $region8
    $region5: #{simple_nn_forward.1} parent=1 // loop_body
      %s18 = ssub.s32 %s13, 1
      %s19 = ssub.s32 %s13, 2
      %s20 = sadd.s32 %s13, 1
      %s21 = ssub.s32 %s13, %s20
      %p22 = scmp.eq.s32.totalorder %s21, 0
      %s24 = sadd.s32 %s23, 1
      %s25 = scalar_select %p22, %s23, %s24
      %p28 = pneg %p22
      %p29 = scmp.eq.s32.totalorder %s13, 3
      %p30 = por %p28, %p29
      %p31 = scmp.ne.s32.totalorder %s23, %s26
      %p32 = scmp.eq.s32.totalorder %s13, 0
      %p33 = por %p31, %p32
      %p34 = scmp.ne.s32.totalorder %s23, %s26
      %p35 = scmp.eq.s32.totalorder %s18, 3
      %p36 = por %p34, %p35
      %p37 = scmp.ne.s32.totalorder %s26, %s27
      %p38 = scmp.eq.s32.totalorder %s18, 0
      %p39 = por %p37, %p38
      %p40 = scmp.ne.s32.totalorder %s26, %s27
      %p41 = scmp.eq.s32.totalorder %s19, 3
      %p42 = por %p40, %p41
      %p44 = scmp.ne.s32.totalorder %s27, %s43
      %p45 = scmp.eq.s32.totalorder %s19, 0
      %p46 = por %p44, %p45
      %s48 = sadd.s32 %s47, 1
      %p51 = scmp.eq.s32.totalorder %s13, 3
      %p52 = scmp.ne.s32.totalorder %s47, %s49
      %p53 = scmp.eq.s32.totalorder %s13, 0
      %p54 = por %p52, %p53
      %p55 = scmp.ne.s32.totalorder %s47, %s49
      %p56 = scmp.eq.s32.totalorder %s18, 3
      %p57 = por %p55, %p56
      %p58 = scmp.ne.s32.totalorder %s49, %s50
      %p59 = scmp.eq.s32.totalorder %s18, 0
      %p60 = por %p58, %p59
      %p61 = scmp.ne.s32.totalorder %s49, %s50
      %p62 = scmp.eq.s32.totalorder %s19, 3
      %p63 = por %p61, %p62
      %p65 = scmp.ne.s32.totalorder %s50, %s64
      %p66 = scmp.eq.s32.totalorder %s19, 0
      %p67 = por %p65, %p66
      %s69 = sadd.s32 %s68, 1
      %p72 = scmp.eq.s32.totalorder %s13, 3
      %p73 = scmp.ne.s32.totalorder %s68, %s70
      %p74 = scmp.eq.s32.totalorder %s13, 0
      %p75 = por %p73, %p74
      %p76 = scmp.ne.s32.totalorder %s68, %s70
      %p77 = scmp.eq.s32.totalorder %s18, 3
      %p78 = por %p76, %p77
      %p79 = scmp.ne.s32.totalorder %s70, %s71
      %p80 = scmp.eq.s32.totalorder %s18, 0
      %p81 = por %p79, %p80
      %p82 = scmp.ne.s32.totalorder %s70, %s71
      %p83 = scmp.eq.s32.totalorder %s19, 3
      %p84 = por %p82, %p83
      %p86 = scmp.ne.s32.totalorder %s71, %s85
      %p87 = scmp.eq.s32.totalorder %s19, 0
      %p88 = por %p86, %p87
      %s90 = sadd.s32 %s89, 1
      %p93 = scmp.eq.s32.totalorder %s13, 3
      %p94 = scmp.ne.s32.totalorder %s89, %s91
      %p95 = scmp.eq.s32.totalorder %s13, 0
      %p96 = por %p94, %p95
      %p97 = scmp.ne.s32.totalorder %s89, %s91
      %p98 = scmp.eq.s32.totalorder %s18, 3
      %p99 = por %p97, %p98
      %p100 = scmp.ne.s32.totalorder %s91, %s92
      %p101 = scmp.eq.s32.totalorder %s18, 0
      %p102 = por %p100, %p101
      %p103 = scmp.ne.s32.totalorder %s91, %s92
      %p104 = scmp.eq.s32.totalorder %s19, 3
      %p105 = por %p103, %p104
      %p107 = scmp.ne.s32.totalorder %s92, %s106
      %p108 = scmp.eq.s32.totalorder %s19, 0
      %p109 = por %p107, %p108
      %s111 = sadd.s32 %s110, 1
      %p114 = scmp.eq.s32.totalorder %s13, 3
      %p115 = scmp.ne.s32.totalorder %s110, %s112
      %p116 = scmp.eq.s32.totalorder %s13, 0
      %p117 = por %p115, %p116
      %p118 = scmp.ne.s32.totalorder %s110, %s112
      %p119 = scmp.eq.s32.totalorder %s18, 3
      %p120 = por %p118, %p119
      %p121 = scmp.ne.s32.totalorder %s112, %s113
      %p122 = scmp.eq.s32.totalorder %s18, 0
      %p123 = por %p121, %p122
      %p124 = scmp.ne.s32.totalorder %s112, %s113
      %p125 = scmp.eq.s32.totalorder %s19, 3
      %p126 = por %p124, %p125
      %p128 = scmp.ne.s32.totalorder %s113, %s127
      %p129 = scmp.eq.s32.totalorder %s19, 0
      %p130 = por %p128, %p129
      %s132 = sadd.s32 %s131, 1
      %p135 = scmp.eq.s32.totalorder %s13, 3
      %p136 = scmp.ne.s32.totalorder %s131, %s133
      %p137 = scmp.eq.s32.totalorder %s13, 0
      %p138 = por %p136, %p137
      %p139 = scmp.ne.s32.totalorder %s131, %s133
      %p140 = scmp.eq.s32.totalorder %s18, 3
      %p141 = por %p139, %p140
      %p142 = scmp.ne.s32.totalorder %s133, %s134
      %p143 = scmp.eq.s32.totalorder %s18, 0
      %p144 = por %p142, %p143
      %p145 = scmp.ne.s32.totalorder %s133, %s134
      %p146 = scmp.eq.s32.totalorder %s19, 3
      %p147 = por %p145, %p146
      %p149 = scmp.ne.s32.totalorder %s134, %s148
      %p150 = scmp.eq.s32.totalorder %s19, 0
      %p151 = por %p149, %p150
      %s153 = sadd.s32 %s152, 1
      %p156 = scmp.eq.s32.totalorder %s13, 3
      %p157 = scmp.ne.s32.totalorder %s152, %s154
      %p158 = scmp.eq.s32.totalorder %s13, 0
      %p159 = por %p157, %p158
      %p160 = scmp.ne.s32.totalorder %s152, %s154
      %p161 = scmp.eq.s32.totalorder %s18, 3
      %p162 = por %p160, %p161
      %p163 = scmp.ne.s32.totalorder %s154, %s155
      %p164 = scmp.eq.s32.totalorder %s18, 0
      %p165 = por %p163, %p164
      %p166 = scmp.ne.s32.totalorder %s154, %s155
      %p167 = scmp.eq.s32.totalorder %s19, 3
      %p168 = por %p166, %p167
      %p170 = scmp.ne.s32.totalorder %s155, %s169
      %p171 = scmp.eq.s32.totalorder %s19, 0
      %p172 = por %p170, %p171
      %s173 = ssub.s32 %s13, %s20
      %p174 = scmp.eq.s32.totalorder %s173, 0
      %s176 = sadd.s32 %s175, 1
      %s177 = scalar_select %p174, %s175, %s176
      %p180 = pneg %p174
      %p181 = scmp.eq.s32.totalorder %s13, 3
      %p182 = por %p180, %p181
      %p183 = scmp.ne.s32.totalorder %s175, %s178
      %p184 = scmp.eq.s32.totalorder %s13, 0
      %p185 = por %p183, %p184
      %p186 = scmp.ne.s32.totalorder %s175, %s178
      %p187 = scmp.eq.s32.totalorder %s18, 3
      %p188 = por %p186, %p187
      %p189 = scmp.ne.s32.totalorder %s178, %s179
      %p190 = scmp.eq.s32.totalorder %s18, 0
      %p191 = por %p189, %p190
      %p192 = scmp.ne.s32.totalorder %s178, %s179
      %p193 = scmp.eq.s32.totalorder %s19, 3
      %p194 = por %p192, %p193
      %p196 = scmp.ne.s32.totalorder %s179, %s195
      %p197 = scmp.eq.s32.totalorder %s19, 0
      %p198 = por %p196, %p197
      %p199 = scmp.le.s32.totalorder 1, %s13
      %p200 = scmp.lt.s32.totalorder %s13, 5
      %p201 = pnand %p199, %p200
      %p202 = pneg %p201
      // Predicated region
      $region9: #{simple_nn_forward.1} parent=5 // pred_check
        _
      $region10: #{simple_nn_forward.1} parent=5 // pred_check_branch
        %204 = sbr.rel (%p201) target = $region12
      $region11: #{simple_nn_forward.1} parent=5 // pred_region
        %s205 = ssub.s32 %s13, 1
        // Predicated region
        $region13: #{simple_nn_forward.1} parent=11 // pred_check
          %p206 = pneg %p60
        $region14: #{simple_nn_forward.1} parent=11 // pred_check_branch
          %208 = sbr.rel (%p206) target = $region16
        $region15: #{simple_nn_forward.1} parent=11 // pred_region
          _
        $region16: #{simple_nn_forward.1} parent=11 // pred_fallthru
          _
        // Predicated region
        $region17: #{simple_nn_forward.1} parent=11 // pred_check
          %p209 = pneg %p81
        $region18: #{simple_nn_forward.1} parent=11 // pred_check_branch
          %211 = sbr.rel (%p209) target = $region20
        $region19: #{simple_nn_forward.1} parent=11 // pred_region
          _
        $region20: #{simple_nn_forward.1} parent=11 // pred_fallthru
          _
        // Predicated region
        $region21: #{simple_nn_forward.1} parent=11 // pred_check
          %p212 = pneg %p102
        $region22: #{simple_nn_forward.1} parent=11 // pred_check_branch
          %214 = sbr.rel (%p212) target = $region24
        $region23: #{simple_nn_forward.1} parent=11 // pred_region
          _
        $region24: #{simple_nn_forward.1} parent=11 // pred_fallthru
          _
        // Predicated region
        $region25: #{simple_nn_forward.1} parent=11 // pred_check
          %p215 = pneg %p123
        $region26: #{simple_nn_forward.1} parent=11 // pred_check_branch
          %217 = sbr.rel (%p215) target = $region28
        $region27: #{simple_nn_forward.1} parent=11 // pred_region
          _
        $region28: #{simple_nn_forward.1} parent=11 // pred_fallthru
          _
        // Predicated region
        $region29: #{simple_nn_forward.1} parent=11 // pred_check
          %p218 = pneg %p144
        $region30: #{simple_nn_forward.1} parent=11 // pred_check_branch
          %220 = sbr.rel (%p218) target = $region32
        $region31: #{simple_nn_forward.1} parent=11 // pred_region
          _
        $region32: #{simple_nn_forward.1} parent=11 // pred_fallthru
          _
        // Predicated region
        $region33: #{simple_nn_forward.1} parent=11 // pred_check
          %p221 = pneg %p165
        $region34: #{simple_nn_forward.1} parent=11 // pred_check_branch
          %223 = sbr.rel (%p221) target = $region36
        $region35: #{simple_nn_forward.1} parent=11 // pred_region
          _
        $region36: #{simple_nn_forward.1} parent=11 // pred_fallthru
          _
      $region12: #{simple_nn_forward.1} parent=5 // pred_fallthru
        _
      %p224 = scmp.lt.s32.totalorder %s13, 4
      // Predicated region
      $region37: #{simple_nn_forward.1} parent=5 // pred_check
        %p225 = pneg %p224
      $region38: #{simple_nn_forward.1} parent=5 // pred_check_branch
        %227 = sbr.rel (%p225) target = $region40
      $region39: #{simple_nn_forward.1} parent=5 // pred_region
        // Predicated region
        $region41: #{simple_nn_forward.1} parent=39 // pred_check
          %p228 = pneg %p33
        $region42: #{simple_nn_forward.1} parent=39 // pred_check_branch
          %230 = sbr.rel (%p228) target = $region44
        $region43: #{simple_nn_forward.1} parent=39 // pred_region
          %s231 = smul.u32 7, %s13
          %s232 = ssub.s32 25, %s231
          %p233 = scmp.lt.s32.totalorder %s232, 7
          %s234 = scalar_select %p233, %s232, 7
          %s235 = smul.u32 8, %s234
          %p236 = scmp.lt.s32.totalorder %s231, 24
          %s237 = scalar_select %p236, %s231, 24
          %s238 = smul.addr %s237, 8
          %s239 = scalar_lea.vmem %s0, %s238
          %s240 = smul.u32 7, %s13
          %s241 = ssub.s32 25, %s240
          %p242 = scmp.lt.s32.totalorder %s241, 7
          %s243 = scalar_select %p242, %s241, 7
          %s244 = smul.u32 8, %s243
        $region44: #{simple_nn_forward.1} parent=39 // pred_fallthru
          _
      $region40: #{simple_nn_forward.1} parent=5 // pred_fallthru
        _
      %p245 = scmp.le.s32.totalorder 1, %s13
      %p246 = scmp.lt.s32.totalorder %s13, 5
      %p247 = pnand %p245, %p246
      %p248 = pneg %p247
      // Predicated region
      $region45: #{simple_nn_forward.1} parent=5 // pred_check
        _
      $region46: #{simple_nn_forward.1} parent=5 // pred_check_branch
        %250 = sbr.rel (%p247) target = $region48
      $region47: #{simple_nn_forward.1} parent=5 // pred_region
        %s251 = ssub.s32 %s13, 1
        %s252 = smul.u32 7, %s18
        %s253 = ssub.s32 25, %s252
        %p254 = scmp.lt.s32.totalorder %s253, 7
        %s255 = scalar_select %p254, %s253, 7
        %s256 = smul.u32 8, %s255
        %p257 = scmp.lt.s32.totalorder %s252, 24
        %s258 = scalar_select %p257, %s252, 24
        %s259 = smul.addr %s258, 8
        %s260 = scalar_lea.vmem %s0, %s259
        %p261 = pneg %p39
        %p262 = pneg %p36
        %p263 = pneg %p60
        %p264 = pneg %p57
        %p265 = pneg %p81
        %p266 = pneg %p78
        %p267 = pneg %p102
        %p268 = pneg %p99
        %p269 = pneg %p123
        %p270 = pneg %p120
        %p271 = pneg %p144
        %p272 = pneg %p141
        %p273 = pneg %p165
        %p274 = pneg %p162
        %p275 = pneg %p191
        %p276 = pneg %p188
        %s277 = sand.u32 %s178, 1
        %s278 = sand.u32 %s178, 1
        %s279 = smul.addr %s278, 56
        %s280 = scalar_lea.vmem [#allocation2], %s279
        %s281 = smul.u32 7, %s18
        %s282 = ssub.s32 25, %s281
        %p283 = scmp.lt.s32.totalorder %s282, 7
        %s284 = scalar_select %p283, %s282, 7
        %s285 = smul.u32 8, %s284
        %p286 = scmp.lt.s32.totalorder %s281, 24
        %s287 = scalar_select %p286, %s281, 24
        %s288 = smul.addr %s287, 8
        %s289 = scalar_lea.vmem %s0, %s288
        %s290 = smul.u32 7, %s18
        %s291 = ssub.s32 25, %s290
        %p292 = scmp.lt.s32.totalorder %s291, 7
        %s293 = scalar_select %p292, %s291, 7
        %s294 = smul.u32 8, %s293
        %s295 = smul.u32 7, %s18
        %s296 = ssub.s32 25, %s295
        %p297 = scmp.lt.s32.totalorder %s296, 7
        %s298 = scalar_select %p297, %s296, 7
        %s299 = smul.u32 8, %s298
        %v300 = vld [vmem:[%s289] sm:$0xff]
        %v301 = vld [vmem:[%s289 + $0x8] sm:$0xff]
        %v302 = vld [vmem:[%s289 + $0x10] sm:$0xff]
        %v303 = vld [vmem:[%s289 + $0x18] sm:$0xff]
        %v304 = vld [vmem:[%s289 + $0x20] sm:$0xff]
        %v305 = vld [vmem:[%s289 + $0x28] sm:$0xff]
        %v306 = vld [vmem:[%s289 + $0x30] sm:$0xff]
        %v307 = vld [vmem:[%s1] sm:$0xff]
        %v308 = vld [vmem:[%s1 + $0x8] sm:$0xff]
        %v309 = vld [vmem:[%s2] sm:$0x1]
        %v311 = vperm.slane %v309, 0
        %vm313 = vcmask 130048
        %v315 = vsel %vm313, %v300, 0
        %v318 = vsel %vm313, %v301, 0
        %v321 = vsel %vm313, %v302, 0
        %v324 = vsel %vm313, %v303, 0
        %v327 = vsel %vm313, %v304, 0
        %v330 = vsel %vm313, %v305, 0
        %v333 = vsel %vm313, %v306, 0
        %335 = vmatpush.msra.mxu0 0.0
        %336 = vmatpush.msra.mxu0 0.0
        %337 = vmatpush.msra.mxu0 0.0
        %338 = vmatpush.msra.mxu0 0.0
        %339 = vmatpush.msra.mxu0 0.0
        %340 = vmatpush.msra.mxu0 0.0
        %341 = vmatpush.msra.mxu0 0.0
        %342 = vmatpush.msra.mxu0 0.0
        %343 = vmatpush.msra.mxu0 0.0
        %344 = vmatpush.msra.mxu0 0.0
        %345 = vmatpush.msra.mxu0 0.0
        %346 = vmatpush.msra.mxu0 0.0
        %347 = vmatpush.msra.mxu0 0.0
        %348 = vmatpush.msra.mxu0 0.0
        %349 = vmatpush.msra.mxu0 %v308
        %350 = vmatpush.msra.mxu0 %v307
        %351 = vmatmul.f32.gmra.mxu0 %v315
        %v352 = vpop.f32.mrf.mxu0
        %v353 = vadd.f32 %v311, %v352
        %354 = vmatmul.f32.gmra.mxu0 %v318
        %v355 = vpop.f32.mrf.mxu0
        %v356 = vadd.f32 %v311, %v355
        %357 = vmatmul.f32.gmra.mxu0 %v321
        %v358 = vpop.f32.mrf.mxu0
        %v359 = vadd.f32 %v311, %v358
        %360 = vmatmul.f32.gmra.mxu0 %v324
        %v361 = vpop.f32.mrf.mxu0
        %v362 = vadd.f32 %v311, %v361
        %363 = vmatmul.f32.gmra.mxu0 %v327
        %v364 = vpop.f32.mrf.mxu0
        %v365 = vadd.f32 %v311, %v364
        %366 = vmatmul.f32.gmra.mxu0 %v330
        %v367 = vpop.f32.mrf.mxu0
        %v368 = vadd.f32 %v311, %v367
        %369 = vmatmul.f32.gmra.mxu0 %v333
        %v370 = vpop.f32.mrf.mxu0
        %v371 = vadd.f32 %v311, %v370
        %372 = vdwg.mxu0
        %v373 = vmax.f32 %v353, 0.0
        %v374 = vmax.f32 %v356, 0.0
        %v375 = vmax.f32 %v359, 0.0
        %v376 = vmax.f32 %v362, 0.0
        %v377 = vmax.f32 %v365, 0.0
        %v378 = vmax.f32 %v368, 0.0
        %v379 = vmax.f32 %v371, 0.0
        %v380 = vld [vmem:[%s3] sm:$0xff]
        %v381 = vld [vmem:[%s3 + $0x8] sm:$0xff]
        %v382 = vld [vmem:[%s3 + $0x10] sm:$0xff]
        %v383 = vld [vmem:[%s3 + $0x18] sm:$0xff]
        %v384 = vld [vmem:[%s3 + $0x20] sm:$0xff]
        %v385 = vld [vmem:[%s3 + $0x28] sm:$0xff]
        %v386 = vld [vmem:[%s3 + $0x30] sm:$0xff]
        %v387 = vld [vmem:[%s3 + $0x38] sm:$0xff]
        %v388 = vld [vmem:[%s3 + $0x40] sm:$0xff]
        %v389 = vld [vmem:[%s3 + $0x48] sm:$0xff]
        %v390 = vld [vmem:[%s3 + $0x50] sm:$0xff]
        %v391 = vld [vmem:[%s3 + $0x58] sm:$0xff]
        %v392 = vld [vmem:[%s3 + $0x60] sm:$0xff]
        %v393 = vld [vmem:[%s3 + $0x68] sm:$0xff]
        %v394 = vld [vmem:[%s3 + $0x70] sm:$0xff]
        %v395 = vld [vmem:[%s3 + $0x78] sm:$0xff]
        %v396 = vld [vmem:[%s4] sm:$0x1]
        %v398 = vperm.slane %v396, 0
        %400 = vmatpush.msra.mxu0 %v395
        %401 = vmatpush.msra.mxu0 %v394
        %402 = vmatpush.msra.mxu0 %v393
        %403 = vmatpush.msra.mxu0 %v392
        %404 = vmatpush.msra.mxu0 %v391
        %405 = vmatpush.msra.mxu0 %v390
        %406 = vmatpush.msra.mxu0 %v389
        %407 = vmatpush.msra.mxu0 %v388
        %408 = vmatpush.msra.mxu0 %v387
        %409 = vmatpush.msra.mxu0 %v386
        %410 = vmatpush.msra.mxu0 %v385
        %411 = vmatpush.msra.mxu0 %v384
        %412 = vmatpush.msra.mxu0 %v383
        %413 = vmatpush.msra.mxu0 %v382
        %414 = vmatpush.msra.mxu0 %v381
        %415 = vmatpush.msra.mxu0 %v380
        %416 = vmatmul.f32.gmra.mxu0 %v373
        %v417 = vpop.f32.mrf.mxu0
        %v418 = vadd.f32 %v398, %v417
        %419 = vmatmul.f32.gmra.mxu0 %v374
        %v420 = vpop.f32.mrf.mxu0
        %v421 = vadd.f32 %v398, %v420
        %422 = vmatmul.f32.gmra.mxu0 %v375
        %v423 = vpop.f32.mrf.mxu0
        %v424 = vadd.f32 %v398, %v423
        %425 = vmatmul.f32.gmra.mxu0 %v376
        %v426 = vpop.f32.mrf.mxu0
        %v427 = vadd.f32 %v398, %v426
        %428 = vmatmul.f32.gmra.mxu0 %v377
        %v429 = vpop.f32.mrf.mxu0
        %v430 = vadd.f32 %v398, %v429
        %431 = vmatmul.f32.gmra.mxu0 %v378
        %v432 = vpop.f32.mrf.mxu0
        %v433 = vadd.f32 %v398, %v432
        %434 = vmatmul.f32.gmra.mxu0 %v379
        %v435 = vpop.f32.mrf.mxu0
        %v436 = vadd.f32 %v398, %v435
        %437 = vdwg.mxu0
        %v438 = vmax.f32 %v418, 0.0
        %v439 = vmax.f32 %v421, 0.0
        %v440 = vmax.f32 %v424, 0.0
        %v441 = vmax.f32 %v427, 0.0
        %v442 = vmax.f32 %v430, 0.0
        %v443 = vmax.f32 %v433, 0.0
        %v444 = vmax.f32 %v436, 0.0
        %v445 = vld [vmem:[%s5] sm:$0xff]
        %v446 = vld [vmem:[%s5 + $0x8] sm:$0xff]
        %v447 = vld [vmem:[%s5 + $0x10] sm:$0xff]
        %v448 = vld [vmem:[%s5 + $0x18] sm:$0xff]
        %v449 = vld [vmem:[%s5 + $0x20] sm:$0xff]
        %v450 = vld [vmem:[%s5 + $0x28] sm:$0xff]
        %v451 = vld [vmem:[%s5 + $0x30] sm:$0xff]
        %v452 = vld [vmem:[%s5 + $0x38] sm:$0xff]
        %v453 = vld [vmem:[%s5 + $0x40] sm:$0xff]
        %v454 = vld [vmem:[%s5 + $0x48] sm:$0xff]
        %v455 = vld [vmem:[%s5 + $0x50] sm:$0xff]
        %v456 = vld [vmem:[%s5 + $0x58] sm:$0xff]
        %v457 = vld [vmem:[%s5 + $0x60] sm:$0xff]
        %v458 = vld [vmem:[%s5 + $0x68] sm:$0xff]
        %v459 = vld [vmem:[%s5 + $0x70] sm:$0xff]
        %v460 = vld [vmem:[%s5 + $0x78] sm:$0xff]
        %v461 = vld [vmem:[%s6] sm:$0x1]
        %v463 = vperm.slane %v461, 0
        %465 = vmatpush.msra.mxu0 %v460
        %466 = vmatpush.msra.mxu0 %v459
        %467 = vmatpush.msra.mxu0 %v458
        %468 = vmatpush.msra.mxu0 %v457
        %469 = vmatpush.msra.mxu0 %v456
        %470 = vmatpush.msra.mxu0 %v455
        %471 = vmatpush.msra.mxu0 %v454
        %472 = vmatpush.msra.mxu0 %v453
        %473 = vmatpush.msra.mxu0 %v452
        %474 = vmatpush.msra.mxu0 %v451
        %475 = vmatpush.msra.mxu0 %v450
        %476 = vmatpush.msra.mxu0 %v449
        %477 = vmatpush.msra.mxu0 %v448
        %478 = vmatpush.msra.mxu0 %v447
        %479 = vmatpush.msra.mxu0 %v446
        %480 = vmatpush.msra.mxu0 %v445
        %481 = vmatmul.f32.gmra.mxu0 %v438
        %v482 = vpop.f32.mrf.mxu0
        %v483 = vadd.f32 %v463, %v482
        %484 = vmatmul.f32.gmra.mxu0 %v439
        %v485 = vpop.f32.mrf.mxu0
        %v486 = vadd.f32 %v463, %v485
        %487 = vmatmul.f32.gmra.mxu0 %v440
        %v488 = vpop.f32.mrf.mxu0
        %v489 = vadd.f32 %v463, %v488
        %490 = vmatmul.f32.gmra.mxu0 %v441
        %v491 = vpop.f32.mrf.mxu0
        %v492 = vadd.f32 %v463, %v491
        %493 = vmatmul.f32.gmra.mxu0 %v442
        %v494 = vpop.f32.mrf.mxu0
        %v495 = vadd.f32 %v463, %v494
        %496 = vmatmul.f32.gmra.mxu0 %v443
        %v497 = vpop.f32.mrf.mxu0
        %v498 = vadd.f32 %v463, %v497
        %499 = vmatmul.f32.gmra.mxu0 %v444
        %v500 = vpop.f32.mrf.mxu0
        %v501 = vadd.f32 %v463, %v500
        %502 = vdwg.mxu0
        %503 = vmax.xlane.f32.xlu0 %v483
        %v504 = vpop.xlane.xlu0 %503
        %505 = vmax.xlane.f32.xlu0 %v486
        %v506 = vpop.xlane.xlu0 %505
        %507 = vmax.xlane.f32.xlu0 %v489
        %v508 = vpop.xlane.xlu0 %507
        %509 = vmax.xlane.f32.xlu0 %v492
        %v510 = vpop.xlane.xlu0 %509
        %511 = vmax.xlane.f32.xlu0 %v495
        %v512 = vpop.xlane.xlu0 %511
        %513 = vmax.xlane.f32.xlu0 %v498
        %v514 = vpop.xlane.xlu0 %513
        %515 = vmax.xlane.f32.xlu0 %v501
        %v516 = vpop.xlane.xlu0 %515
        %v517 = vsub.f32 %v483, %v504
        %v518 = vsub.f32 %v486, %v506
        %v519 = vsub.f32 %v489, %v508
        %v520 = vsub.f32 %v492, %v510
        %v521 = vsub.f32 %v495, %v512
        %v522 = vsub.f32 %v498, %v514
        %v523 = vsub.f32 %v501, %v516
        %v524 = vmul.f32 %v517, 1.442695
        %v525 = vpow.pop %v524
        %v526 = vmul.f32 %v518, 1.442695
        %v527 = vpow.pop %v526
        %v528 = vmul.f32 %v519, 1.442695
        %v529 = vpow.pop %v528
        %v530 = vmul.f32 %v520, 1.442695
        %v531 = vpow.pop %v530
        %v532 = vmul.f32 %v521, 1.442695
        %v533 = vpow.pop %v532
        %v534 = vmul.f32 %v522, 1.442695
        %v535 = vpow.pop %v534
        %v536 = vmul.f32 %v523, 1.442695
        %v537 = vpow.pop %v536
        %538 = vadd.xlane.f32.xlu0 %v525
        %v539 = vpop.xlane.xlu0 %538
        %540 = vadd.xlane.f32.xlu0 %v527
        %v541 = vpop.xlane.xlu0 %540
        %542 = vadd.xlane.f32.xlu0 %v529
        %v543 = vpop.xlane.xlu0 %542
        %544 = vadd.xlane.f32.xlu0 %v531
        %v545 = vpop.xlane.xlu0 %544
        %546 = vadd.xlane.f32.xlu0 %v533
        %v547 = vpop.xlane.xlu0 %546
        %548 = vadd.xlane.f32.xlu0 %v535
        %v549 = vpop.xlane.xlu0 %548
        %550 = vadd.xlane.f32.xlu0 %v537
        %v551 = vpop.xlane.xlu0 %550
        %v552 = vrcp.pop %v539
        %v553 = vmul.f32 %v539, %v552
        %v554 = vsub.f32 1.0, %v553
        %v555 = vmul.f32 %v552, %v554
        %v556 = vadd.f32 %v552, %v555
        %vm557 = vweird.f32 %v539
        %vm558 = vweird.f32 %v552
        %vm559 = vmor %vm557, %vm558
        %v560 = vsel %vm559, %v552, %v556
        %v561 = vand.u32 2147483647, %v539
        %vm562 = vcmp.eq.f32.partialorder %v561, 8.507059e+37
        %v563 = vand.u32 %v539, 2147483648
        %v564 = vor.u32 1.1754944e-38, %v563
        %v565 = vsel %vm562, %v564, %v560
        %v566 = vmul.f32 %v525, %v565
        %v567 = vrcp.pop %v541
        %v568 = vmul.f32 %v541, %v567
        %v569 = vsub.f32 1.0, %v568
        %v570 = vmul.f32 %v567, %v569
        %v571 = vadd.f32 %v567, %v570
        %vm572 = vweird.f32 %v541
        %vm573 = vweird.f32 %v567
        %vm574 = vmor %vm572, %vm573
        %v575 = vsel %vm574, %v567, %v571
        %v576 = vand.u32 2147483647, %v541
        %vm577 = vcmp.eq.f32.partialorder %v576, 8.507059e+37
        %v578 = vand.u32 %v541, 2147483648
        %v579 = vor.u32 1.1754944e-38, %v578
        %v580 = vsel %vm577, %v579, %v575
        %v581 = vmul.f32 %v527, %v580
        %v582 = vrcp.pop %v543
        %v583 = vmul.f32 %v543, %v582
        %v584 = vsub.f32 1.0, %v583
        %v585 = vmul.f32 %v582, %v584
        %v586 = vadd.f32 %v582, %v585
        %vm587 = vweird.f32 %v543
        %vm588 = vweird.f32 %v582
        %vm589 = vmor %vm587, %vm588
        %v590 = vsel %vm589, %v582, %v586
        %v591 = vand.u32 2147483647, %v543
        %vm592 = vcmp.eq.f32.partialorder %v591, 8.507059e+37
        %v593 = vand.u32 %v543, 2147483648
        %v594 = vor.u32 1.1754944e-38, %v593
        %v595 = vsel %vm592, %v594, %v590
        %v596 = vmul.f32 %v529, %v595
        %v597 = vrcp.pop %v545
        %v598 = vmul.f32 %v545, %v597
        %v599 = vsub.f32 1.0, %v598
        %v600 = vmul.f32 %v597, %v599
        %v601 = vadd.f32 %v597, %v600
        %vm602 = vweird.f32 %v545
        %vm603 = vweird.f32 %v597
        %vm604 = vmor %vm602, %vm603
        %v605 = vsel %vm604, %v597, %v601
        %v606 = vand.u32 2147483647, %v545
        %vm607 = vcmp.eq.f32.partialorder %v606, 8.507059e+37
        %v608 = vand.u32 %v545, 2147483648
        %v609 = vor.u32 1.1754944e-38, %v608
        %v610 = vsel %vm607, %v609, %v605
        %v611 = vmul.f32 %v531, %v610
        %v612 = vrcp.pop %v547
        %v613 = vmul.f32 %v547, %v612
        %v614 = vsub.f32 1.0, %v613
        %v615 = vmul.f32 %v612, %v614
        %v616 = vadd.f32 %v612, %v615
        %vm617 = vweird.f32 %v547
        %vm618 = vweird.f32 %v612
        %vm619 = vmor %vm617, %vm618
        %v620 = vsel %vm619, %v612, %v616
        %v621 = vand.u32 2147483647, %v547
        %vm622 = vcmp.eq.f32.partialorder %v621, 8.507059e+37
        %v623 = vand.u32 %v547, 2147483648
        %v624 = vor.u32 1.1754944e-38, %v623
        %v625 = vsel %vm622, %v624, %v620
        %v626 = vmul.f32 %v533, %v625
        %v627 = vrcp.pop %v549
        %v628 = vmul.f32 %v549, %v627
        %v629 = vsub.f32 1.0, %v628
        %v630 = vmul.f32 %v627, %v629
        %v631 = vadd.f32 %v627, %v630
        %vm632 = vweird.f32 %v549
        %vm633 = vweird.f32 %v627
        %vm634 = vmor %vm632, %vm633
        %v635 = vsel %vm634, %v627, %v631
        %v636 = vand.u32 2147483647, %v549
        %vm637 = vcmp.eq.f32.partialorder %v636, 8.507059e+37
        %v638 = vand.u32 %v549, 2147483648
        %v639 = vor.u32 1.1754944e-38, %v638
        %v640 = vsel %vm637, %v639, %v635
        %v641 = vmul.f32 %v535, %v640
        %v642 = vrcp.pop %v551
        %v643 = vmul.f32 %v551, %v642
        %v644 = vsub.f32 1.0, %v643
        %v645 = vmul.f32 %v642, %v644
        %v646 = vadd.f32 %v642, %v645
        %vm647 = vweird.f32 %v551
        %vm648 = vweird.f32 %v642
        %vm649 = vmor %vm647, %vm648
        %v650 = vsel %vm649, %v642, %v646
        %v651 = vand.u32 2147483647, %v551
        %vm652 = vcmp.eq.f32.partialorder %v651, 8.507059e+37
        %v653 = vand.u32 %v551, 2147483648
        %v654 = vor.u32 1.1754944e-38, %v653
        %v655 = vsel %vm652, %v654, %v650
        %v656 = vmul.f32 %v537, %v655
        %vm657 = vcmask 31744
        %658 = vst.msk [vmem:[%s280] sm:$0xff] %vm657, %v566
        %659 = vst.msk [vmem:[%s280 + $0x8] sm:$0xff] %vm657, %v581
        %660 = vst.msk [vmem:[%s280 + $0x10] sm:$0xff] %vm657, %v596
        %661 = vst.msk [vmem:[%s280 + $0x18] sm:$0xff] %vm657, %v611
        %662 = vst.msk [vmem:[%s280 + $0x20] sm:$0xff] %vm657, %v626
        %663 = vst.msk [vmem:[%s280 + $0x28] sm:$0xff] %vm657, %v641
        %664 = vst.msk [vmem:[%s280 + $0x30] sm:$0xff] %vm657, %v656
        %s665 = sand.u32 %s178, 1
        %s666 = sand.u32 %s178, 1
        %s667 = smul.addr %s666, 56
        %s668 = scalar_lea.vmem [#allocation2], %s667
        // Predicated region
        $region49: #{simple_nn_forward.1} parent=47 // pred_check
          %p669 = pneg %p188
        $region50: #{simple_nn_forward.1} parent=47 // pred_check_branch
          %671 = sbr.rel (%p669) target = $region52
        $region51: #{simple_nn_forward.1} parent=47 // pred_region
          %s672 = smul.u32 7, %s18
          %s673 = ssub.s32 25, %s672
          %p674 = scmp.lt.s32.totalorder %s673, 7
          %s675 = scalar_select %p674, %s673, 7
          %s676 = smul.u32 8, %s675
          %p677 = scmp.ne.s32.totalorder 0, %s676
          %s678 = smul.addr %s672, 8
          %s679 = scalar_lea.vmem %s7, %s678
          // Predicated region
          $region53: #{simple_nn_forward.1} parent=51 // pred_check
            %p680 = pneg %p677
          $region54: #{simple_nn_forward.1} parent=51 // pred_check_branch
            %682 = sbr.rel (%p680) target = $region56
          $region55: #{simple_nn_forward.1} parent=51 // pred_region
            // Predicated region
            $region57: #{simple_nn_forward.1} parent=55 // pred_check
              _
            $region58: #{simple_nn_forward.1} parent=55 // pred_check_branch
              %684 = sbr.rel (0) target = $region60
            $region59: #{simple_nn_forward.1} parent=55 // pred_region
              // Predicated region
              $region79: #{simple_nn_forward.1} parent=59 // pred_check
                _
              $region80: #{simple_nn_forward.1} parent=59 // pred_check_branch
                %747 = sbr.rel (0) target = $region82
              $region81: #{simple_nn_forward.1} parent=59 // pred_region
                %s748 = sdiv.u32.pop %s675, 7
                %s749 = srem.u32.pop %s675, 7
                // While loop
                $region83: #{simple_nn_forward.1} parent=81 // loop_pre_header
                  _
                $region84: #{simple_nn_forward.1} parent=81 // loop_header
                  %s751 = sphi 0, %s753
                  %p752 = scmp.ge.s32.totalorder %s751, %s748
                  %s756 = sphi 0, %s775
                  %s757 = sphi %s668, %s778
                  %s758 = sphi %s679, %s779
                $region85: #{simple_nn_forward.1} parent=81 // loop_header_branch
                  %755 = sbr.rel (%p752) target = $region89
                $region86: #{simple_nn_forward.1} parent=81 // loop_body
                  %v759 = vld [vmem:[%s757] sm:$0xff]
                  %760 = vst [vmem:[%s758] sm:$0xff] %v759
                  %v761 = vld [vmem:[%s757 + $0x8] sm:$0xff]
                  %762 = vst [vmem:[%s758 + $0x8] sm:$0xff] %v761
                  %v763 = vld [vmem:[%s757 + $0x10] sm:$0xff]
                  %764 = vst [vmem:[%s758 + $0x10] sm:$0xff] %v763
                  %v765 = vld [vmem:[%s757 + $0x18] sm:$0xff]
                  %766 = vst [vmem:[%s758 + $0x18] sm:$0xff] %v765
                  %v767 = vld [vmem:[%s757 + $0x20] sm:$0xff]
                  %768 = vst [vmem:[%s758 + $0x20] sm:$0xff] %v767
                  %v769 = vld [vmem:[%s757 + $0x28] sm:$0xff]
                  %770 = vst [vmem:[%s758 + $0x28] sm:$0xff] %v769
                  %v771 = vld [vmem:[%s757 + $0x30] sm:$0xff]
                  %772 = vst [vmem:[%s758 + $0x30] sm:$0xff] %v771
                  %s773 = sadd.s32 1, %s756
                  %p774 = scmp.ge.s32.totalorder %s773, %s748
                  %s775 = scalar_select %p774, 0, %s773
                  %s776 = smul.u32 %s775, 56
                  %s777 = smul.u32 %s775, 56
                  %s778 = scalar_lea.vmem %s668, %s776 [#allocation2]
                  %s779 = scalar_lea.vmem %s679, %s777
                $region87: #{simple_nn_forward.1} parent=81 // loop_footer
                  %s753 = sadd.s32 %s751, 1
                $region88: #{simple_nn_forward.1} parent=81 // loop_footer_branch
                  %750 = sbr.rel target = $region84
                $region89: #{simple_nn_forward.1} parent=81 // loop_exit
                  _
                %s780 = sdiv.u32.pop %s675, 7
                %s781 = srem.u32.pop %s675, 7
                %s782 = smul.u32 %s780, 7
                %s783 = smul.u32 8, %s782
                %s784 = scalar_lea.vmem %s668, %s783 [#allocation2]
                %s785 = smul.u32 8, %s782
                %s786 = scalar_lea.vmem %s679, %s785
                // While loop
                $region90: #{simple_nn_forward.1} parent=81 // loop_pre_header
                  _
                $region91: #{simple_nn_forward.1} parent=81 // loop_header
                  %s788 = sphi 0, %s790
                  %p789 = scmp.ge.s32.totalorder %s788, %s781
                  %s793 = sphi 0, %s800
                  %s794 = sphi %s784, %s803
                  %s795 = sphi %s786, %s804
                $region92: #{simple_nn_forward.1} parent=81 // loop_header_branch
                  %792 = sbr.rel (%p789) target = $region96
                $region93: #{simple_nn_forward.1} parent=81 // loop_body
                  %v796 = vld [vmem:[%s794] sm:$0xff]
                  %797 = vst [vmem:[%s795] sm:$0xff] %v796
                  %s798 = sadd.s32 1, %s793
                  %p799 = scmp.ge.s32.totalorder %s798, %s781
                  %s800 = scalar_select %p799, 0, %s798
                  %s801 = smul.u32 %s800, 8
                  %s802 = smul.u32 %s800, 8
                  %s803 = scalar_lea.vmem %s784, %s801 [#allocation2]
                  %s804 = scalar_lea.vmem %s786, %s802
                $region94: #{simple_nn_forward.1} parent=81 // loop_footer
                  %s790 = sadd.s32 %s788, 1
                $region95: #{simple_nn_forward.1} parent=81 // loop_footer_branch
                  %787 = sbr.rel target = $region91
                $region96: #{simple_nn_forward.1} parent=81 // loop_exit
                  _
              $region82: #{simple_nn_forward.1} parent=59 // pred_fallthru
                _
              // Predicated region
              $region97: #{simple_nn_forward.1} parent=59 // pred_check
                _
              $region98: #{simple_nn_forward.1} parent=59 // pred_check_branch
                %806 = sbr.rel target = $region100
              $region99: #{simple_nn_forward.1} parent=59 // pred_region
                _
              $region100: #{simple_nn_forward.1} parent=59 // pred_fallthru
                _
            $region60: #{simple_nn_forward.1} parent=55 // pred_fallthru
              _
            // Predicated region
            $region61: #{simple_nn_forward.1} parent=55 // pred_check
              _
            $region62: #{simple_nn_forward.1} parent=55 // pred_check_branch
              %686 = sbr.rel target = $region64
            $region63: #{simple_nn_forward.1} parent=55 // pred_region
              %s688 = ssub.s32 256, 1
              %s689 = sdiv.u32.pop %s675, 7
              %s690 = srem.u32.pop %s675, 7
              // While loop
              $region65: #{simple_nn_forward.1} parent=63 // loop_pre_header
                _
              $region66: #{simple_nn_forward.1} parent=63 // loop_header
                %s692 = sphi 0, %s694
                %p693 = scmp.ge.s32.totalorder %s692, %s689
                %s697 = sphi 0, %s716
                %s698 = sphi %s668, %s719
                %s699 = sphi %s679, %s720
              $region67: #{simple_nn_forward.1} parent=63 // loop_header_branch
                %696 = sbr.rel (%p693) target = $region71
              $region68: #{simple_nn_forward.1} parent=63 // loop_body
                %v700 = vld [vmem:[%s698] sm:%s688]
                %701 = vst [vmem:[%s699] sm:%s688] %v700
                %v702 = vld [vmem:[%s698 + $0x8] sm:%s688]
                %703 = vst [vmem:[%s699 + $0x8] sm:%s688] %v702
                %v704 = vld [vmem:[%s698 + $0x10] sm:%s688]
                %705 = vst [vmem:[%s699 + $0x10] sm:%s688] %v704
                %v706 = vld [vmem:[%s698 + $0x18] sm:%s688]
                %707 = vst [vmem:[%s699 + $0x18] sm:%s688] %v706
                %v708 = vld [vmem:[%s698 + $0x20] sm:%s688]
                %709 = vst [vmem:[%s699 + $0x20] sm:%s688] %v708
                %v710 = vld [vmem:[%s698 + $0x28] sm:%s688]
                %711 = vst [vmem:[%s699 + $0x28] sm:%s688] %v710
                %v712 = vld [vmem:[%s698 + $0x30] sm:%s688]
                %713 = vst [vmem:[%s699 + $0x30] sm:%s688] %v712
                %s714 = sadd.s32 1, %s697
                %p715 = scmp.ge.s32.totalorder %s714, %s689
                %s716 = scalar_select %p715, 0, %s714
                %s717 = smul.u32 %s716, 56
                %s718 = smul.u32 %s716, 56
                %s719 = scalar_lea.vmem %s668, %s717 [#allocation2]
                %s720 = scalar_lea.vmem %s679, %s718
              $region69: #{simple_nn_forward.1} parent=63 // loop_footer
                %s694 = sadd.s32 %s692, 1
              $region70: #{simple_nn_forward.1} parent=63 // loop_footer_branch
                %691 = sbr.rel target = $region66
              $region71: #{simple_nn_forward.1} parent=63 // loop_exit
                _
              %s721 = sdiv.u32.pop %s675, 7
              %s722 = srem.u32.pop %s675, 7
              %s723 = smul.u32 %s721, 7
              %s724 = smul.u32 8, %s723
              %s725 = scalar_lea.vmem %s668, %s724 [#allocation2]
              %s726 = smul.u32 8, %s723
              %s727 = scalar_lea.vmem %s679, %s726
              // While loop
              $region72: #{simple_nn_forward.1} parent=63 // loop_pre_header
                _
              $region73: #{simple_nn_forward.1} parent=63 // loop_header
                %s729 = sphi 0, %s731
                %p730 = scmp.ge.s32.totalorder %s729, %s722
                %s734 = sphi 0, %s741
                %s735 = sphi %s725, %s744
                %s736 = sphi %s727, %s745
              $region74: #{simple_nn_forward.1} parent=63 // loop_header_branch
                %733 = sbr.rel (%p730) target = $region78
              $region75: #{simple_nn_forward.1} parent=63 // loop_body
                %v737 = vld [vmem:[%s735] sm:%s688]
                %738 = vst [vmem:[%s736] sm:%s688] %v737
                %s739 = sadd.s32 1, %s734
                %p740 = scmp.ge.s32.totalorder %s739, %s722
                %s741 = scalar_select %p740, 0, %s739
                %s742 = smul.u32 %s741, 8
                %s743 = smul.u32 %s741, 8
                %s744 = scalar_lea.vmem %s725, %s742 [#allocation2]
                %s745 = scalar_lea.vmem %s727, %s743
              $region76: #{simple_nn_forward.1} parent=63 // loop_footer
                %s731 = sadd.s32 %s729, 1
              $region77: #{simple_nn_forward.1} parent=63 // loop_footer_branch
                %728 = sbr.rel target = $region73
              $region78: #{simple_nn_forward.1} parent=63 // loop_exit
                _
            $region64: #{simple_nn_forward.1} parent=55 // pred_fallthru
              _
          $region56: #{simple_nn_forward.1} parent=51 // pred_fallthru
            _
          %807 = vnop
        $region52: #{simple_nn_forward.1} parent=47 // pred_fallthru
          _
      $region48: #{simple_nn_forward.1} parent=5 // pred_fallthru
        _
      %p808 = scmp.le.s32.totalorder 2, %s13
      // Predicated region
      $region101: #{simple_nn_forward.1} parent=5 // pred_check
        %p809 = pneg %p808
      $region102: #{simple_nn_forward.1} parent=5 // pred_check_branch
        %811 = sbr.rel (%p809) target = $region104
      $region103: #{simple_nn_forward.1} parent=5 // pred_region
        %s812 = ssub.s32 %s13, 2
        // Predicated region
        $region105: #{simple_nn_forward.1} parent=103 // pred_check
          %p813 = pneg %p194
        $region106: #{simple_nn_forward.1} parent=103 // pred_check_branch
          %815 = sbr.rel (%p813) target = $region108
        $region107: #{simple_nn_forward.1} parent=103 // pred_region
          %s816 = sand.u32 %s179, 1
          %s817 = sand.u32 %s179, 1
          %s818 = smul.addr %s817, 56
          %s819 = scalar_lea.vmem [#allocation2], %s818
        $region108: #{simple_nn_forward.1} parent=103 // pred_fallthru
          _
      $region104: #{simple_nn_forward.1} parent=5 // pred_fallthru
        _
    $region6: #{simple_nn_forward.1} parent=1 // loop_footer
      %s17 = sadd.s32 1, %s13
    $region7: #{simple_nn_forward.1} parent=1 // loop_footer_branch
      %12 = sbr.rel target = $region3
    $region8: #{simple_nn_forward.1} parent=1 // loop_exit
      _

</llo_original>
